<compile_context>
chip_gen: v5e
topology: v5e:2x2
jax: 0.10.0
libtpu: 0.0.40
codegen_flags: <defaults>
</compile_context>

<pallas_src>
import math
import functools

import jax
import jax.numpy as jnp
from jax.experimental import pallas as pl
from jax.experimental.pallas import tpu as pltpu


def _round_up(a, b):
    return (a + b - 1) // b * b


def _pick_tile(dim, preferred, align):
    """Largest multiple of `align` <= `preferred` that evenly divides `dim`;
    falls back to the full dim (always legal under the (8,128) rule)."""
    if dim % align == 0:
        t = min(preferred, dim)
        t -= t % align
        while t >= align and dim % t != 0:
            t -= align
        if t >= align:
            return t
    return dim


# -----------------------------------------------------------------------------
# Fused LoRA-Linear kernel.
# grid = (m_tiles, n_tiles, k_tiles); k (reduction) is the last, "arbitrary"
# axis.  The base matmul accumulates into the resident f32 output block; the
# rank-r LoRA work (and the in-kernel dropout mask) is done once per (m, k)
# under j == 0 and reused by every n tile via a persistent scratch accumulator.
# -----------------------------------------------------------------------------
def _fused_lora_kernel(seed_ref, x_ref, wT_ref, bias_ref, aT_ref, bT_ref,
                       o_ref, lora_acc_ref, *,
                       dropout_p, apply_dropout, k_tiles, k_total):
    i = pl.program_id(0)
    j = pl.program_id(1)
    k = pl.program_id(2)

    @pl.when(k == 0)
    def _init_out():
        o_ref[...] = jnp.zeros_like(o_ref)

    @pl.when((j == 0) & (k == 0))
    def _init_lora():
        lora_acc_ref[...] = jnp.zeros_like(lora_acc_ref)

    x_blk = x_ref[...]                                   # (TM, TK) f32
    x_bf = x_blk.astype(jnp.bfloat16)

    # Base (frozen) linear: bf16 MXU operands, f32 accumulation directly into
    # the resident output block (its index_map is constant in k).
    o_ref[...] += jnp.dot(x_bf, wT_ref[...],
                          preferred_element_type=jnp.float32)

    # LoRA rank-r path: dropout(x) @ A.T, computed once per (i, k) tile.
    @pl.when(j == 0)
    def _lora():
        if apply_dropout:
            tm, tk = x_blk.shape
            # Stateless hash dropout: unique (seed, global element index) per
            # element -> no PRNG stream collisions, no HBM noise tensor, and it
            # lowers on both Mosaic and the interpreter.
            row = jax.lax.broadcasted_iota(jnp.int32, (tm, tk), 0) + i * tm
            col = jax.lax.broadcasted_iota(jnp.int32, (tm, tk), 1) + k * tk
            gid = (row * k_total + col).astype(jnp.uint32)
            h = gid ^ (seed_ref[0].astype(jnp.uint32) * jnp.uint32(0x9E3779B9))
            h = (h ^ (h >> 16)) * jnp.uint32(0x7FEB352D)   # splitmix32-style mix
            h = (h ^ (h >> 15)) * jnp.uint32(0x846CA68B)
            h = h ^ (h >> 16)
            thr = jnp.uint32(int(round(dropout_p * float(1 << 24))))
            keep = (h >> 8) >= thr                         # P(keep) = 1 - p
            x_lora = jnp.where(keep, x_blk * (1.0 / (1.0 - dropout_p)),
                               0.0).astype(jnp.bfloat16)
        else:
            x_lora = x_bf
        lora_acc_ref[...] += jnp.dot(x_lora, aT_ref[...],
                                     preferred_element_type=jnp.float32)

    @pl.when(k == k_tiles - 1)
    def _epilogue():
        # `scaling` is folded into bT at construction time.
        lora_out = jnp.dot(lora_acc_ref[...].astype(jnp.bfloat16), bT_ref[...],
                           preferred_element_type=jnp.float32)
        o_ref[...] += bias_ref[...] + lora_out


class FusedLoRALinearPallas:
    """Pallas port of several LoRALinear layers sharing the same input x
    (e.g. q/k/v projections), fused into a single tiled TPU kernel:
        y_l = x @ W_l.T + b_l + scaling_l * (dropout(x) @ A_l.T @ B_l.T)
    concatenated along the output dimension."""

    def __init__(self, weights, biases, lora_As, lora_Bs, *,
                 lora_alpha=16, lora_dropout=0.1):
        Ws = [jnp.asarray(w, jnp.float32) for w in weights]     # (out_l, in)
        As = [jnp.asarray(a, jnp.float32) for a in lora_As]     # (r_l, in)
        Bs = [jnp.asarray(b, jnp.float32) for b in lora_Bs]     # (out_l, r_l)
        K = int(Ws[0].shape[1])
        assert all(int(w.shape[1]) == K for w in Ws)
        self.in_features = K
        self.out_splits = [int(w.shape[0]) for w in Ws]
        N = sum(self.out_splits)
        self.out_features = N
        rs = [int(a.shape[0]) for a in As]
        R = sum(rs)
        self.r_pad = max(128, _round_up(R, 128))   # lane-dense rank dimension
        self.dropout_p = float(lora_dropout)
        self.training = True

        # Base weights: pre-transposed (K, N), bf16 MXU operands.
        self.wT = jnp.concatenate([w.T for w in Ws], axis=1).astype(jnp.bfloat16)
        bias_parts = []
        for b, n in zip(biases, self.out_splits):
            bias_parts.append(jnp.zeros((n,), jnp.float32) if b is None
                              else jnp.asarray(b, jnp.float32).reshape(n))
        self.bias2 = jnp.concatenate(bias_parts).reshape(1, N)

        # LoRA: A stacked along the (zero-padded) rank dim, B block-diagonal,
        # per-layer scaling folded into B.T.
        aT = jnp.zeros((K, self.r_pad), jnp.float32)
        bT = jnp.zeros((self.r_pad, N), jnp.float32)
        r_off = n_off = 0
        for A, B, r, n in zip(As, Bs, rs, self.out_splits):
            scaling = float(lora_alpha) / float(r)
            aT = aT.at[:, r_off:r_off + r].set(A.T)
            bT = bT.at[r_off:r_off + r, n_off:n_off + n].set(scaling * B.T)
            r_off += r
            n_off += n
        self.aT = aT.astype(jnp.bfloat16)
        self.bT = bT.astype(jnp.bfloat16)

    def train(self):
        self.training = True
        return self

    def eval(self):
        self.training = False
        return self

    def __call__(self, x, seed=0):
        x = jnp.asarray(x, jnp.float32)
        *lead, K = x.shape
        assert K == self.in_features, "last dim must equal in_features"
        M = 1
        for d in lead:
            M *= int(d)
        M = max(M, 1)
        x2 = x.reshape(M, K)
        N, R_pad = self.out_features, self.r_pad

        # ------------------------------ tiling ------------------------------
        TM_PREF, TK_PREF = 512, 512
        if M <= TM_PREF:
            TM, M_pad = M, M                              # full-dim block, no pad
        else:
            TM = _pick_tile(M, TM_PREF, 8) if M % 8 == 0 else M
            if TM == M:                                   # no clean divisor -> pad
                TM = TM_PREF
                M_pad = _round_up(M, TM)
            else:
                M_pad = M
        if M_pad != M:
            x2 = jnp.pad(x2, ((0, M_pad - M), (0, 0)))

        if K <= TK_PREF:
            TK = K
        elif K % 256 == 0:
            TK = _pick_tile(K, TK_PREF, 256)
        else:
            TK = _pick_tile(K, TK_PREF, 128)

        # Double-buffered VMEM footprint for a candidate TN.
        def footprint(tn):
            return (2 * TM * TK * 4            # x (f32)
                    + 2 * TK * tn * 2          # W.T (bf16)
                    + 2 * tn * 4               # bias
                    + 2 * TK * R_pad * 2       # A.T (bf16)
                    + 2 * R_pad * tn * 2       # B.T (bf16)
                    + 2 * TM * tn * 4          # output block (f32)
                    + TM * R_pad * 4)          # LoRA accumulator

        BUDGET = 40 << 20                      # safe on v7x (64 MiB), easy on v5e/v6e
        TN = N
        if footprint(TN) > BUDGET and N % 128 == 0:
            for d in sorted({d for d in range(128, N, 128) if N % d == 0} | {128},
                            reverse=True):
                TN = d
                if footprint(d) <= BUDGET:
                    break

        m_tiles, n_tiles, k_tiles = M_pad // TM, N // TN, K // TK
        apply_dropout = bool(self.training and self.dropout_p > 0.0)

        kernel = functools.partial(
            _fused_lora_kernel,
            dropout_p=self.dropout_p,
            apply_dropout=apply_dropout,
            k_tiles=k_tiles,
            k_total=K,
        )
        seed_arr = jnp.asarray([seed], dtype=jnp.int32)

        flops = (2 * M_pad * K * N + 2 * M_pad * K * R_pad
                 + 2 * M_pad * R_pad * N * n_tiles // max(n_tiles, 1))
        bytes_accessed = (4 * M_pad * K * n_tiles + 2 * K * N * m_tiles
                          + 4 * M_pad * N + 2 * K * R_pad * m_tiles
                          + 2 * R_pad * N * m_tiles)

        grid_spec = pltpu.PrefetchScalarGridSpec(
            num_scalar_prefetch=1,
            grid=(m_tiles, n_tiles, k_tiles),
            in_specs=[
                pl.BlockSpec((TM, TK), lambda i, j, k, s: (i, k)),     # x
                pl.BlockSpec((TK, TN), lambda i, j, k, s: (k, j)),     # W.T
                pl.BlockSpec((1, TN), lambda i, j, k, s: (0, j)),      # bias
                pl.BlockSpec((TK, R_pad), lambda i, j, k, s: (k, 0)),  # A.T
                pl.BlockSpec((R_pad, TN), lambda i, j, k, s: (0, j)),  # B.T
            ],
            out_specs=pl.BlockSpec((TM, TN), lambda i, j, k, s: (i, j)),
            scratch_shapes=[
                pltpu.VMEM((TM, R_pad), jnp.float32),   # rank-r LoRA accumulator
            ],
        )

        out = pl.pallas_call(
            kernel,
            out_shape=jax.ShapeDtypeStruct((M_pad, N), jnp.float32),
            grid_spec=grid_spec,
            compiler_params=pltpu.CompilerParams(
                # lora_acc carries across the n axis -> n must be "arbitrary".
                dimension_semantics=("parallel", "arbitrary", "arbitrary"),
                vmem_limit_bytes=min(56 << 20,
                                     max(32 << 20, footprint(TN) + (8 << 20)))),
            cost_estimate=pl.CostEstimate(
                flops=flops, transcendentals=0, bytes_accessed=bytes_accessed),
        )(seed_arr, x2, self.wT, self.bias2, self.aT, self.bT)

        if M_pad != M:
            out = out[:M]
        return out.reshape(*lead, N) if lead else out.reshape(N)


class ESM2WithLoRAPallas:
    """Minimal stand-in for ESM2WithLoRA: the reference module's own forward
    just delegates to the wrapped ESM model; the compute it actually modifies
    is the target Linear projections (q/k/v), which are swapped for LoRALinear.
    Here those projections are fused into a single Pallas LoRA-Linear kernel."""

    def __init__(self, layers, *, lora_alpha=16, lora_dropout=0.1):
        # layers: dict name -> (W (out,in), b (out,) or None, A (r,in), B (out,r))
        self.names = list(layers.keys())
        Ws, bs, As, Bs = zip(*[layers[n] for n in self.names])
        self.fused = FusedLoRALinearPallas(Ws, bs, As, Bs,
                                           lora_alpha=lora_alpha,
                                           lora_dropout=lora_dropout)
        self.modified_layers = list(self.names)
        self._splits = self.fused.out_splits

    def train(self):
        self.fused.train()
        return self

    def eval(self):
        self.fused.eval()
        return self

    def __call__(self, x, seed=0):
        out = self.fused(x, seed=seed)
        res, off = {}, 0
        for name, n in zip(self.names, self._splits):
            res[name] = out[..., off:off + n]
            off += n
        return res


if __name__ == "__main__":
    key = jax.random.PRNGKey(0)
    batch, seq, d_in, d_out, r, alpha, p_drop = 2, 8, 128, 128, 8, 16, 0.1
    kx, kq, kk, kv = jax.random.split(key, 4)
    x = jax.random.normal(kx, (batch, seq, d_in), jnp.float32)

    def make_params(k):
        k1, k2, k3, k4 = jax.random.split(k, 4)
        W = 0.02 * jax.random.normal(k1, (d_out, d_in), jnp.float32)
        b = 0.02 * jax.random.normal(k2, (d_out,), jnp.float32)
        # Reference init: lora_A kaiming_uniform(a=sqrt(5)) -> bound 1/sqrt(fan_in);
        # lora_B is zeros in the reference — use a small random B here so the LoRA
        # path is numerically exercised by the check.
        bound = 1.0 / math.sqrt(d_in)
        A = jax.random.uniform(k3, (r, d_in), jnp.float32, minval=-bound, maxval=bound)
        B = 0.02 * jax.random.normal(k4, (d_out, r), jnp.float32)
        return W, b, A, B

    model = ESM2WithLoRAPallas({
        "q_proj": make_params(kq),
        "k_proj": make_params(kk),
        "v_proj": make_params(kv),
    }, lora_alpha=alpha, lora_dropout=p_drop)

    # ---- eval mode: dropout is identity -> check against a plain-XLA reference
    # built from the same bf16-rounded operands the kernel feeds the MXU.
    model.eval()
    outs = jax.block_until_ready(model(x))

    fused = model.fused
    hp = jax.lax.Precision.HIGHEST
    x2 = x.reshape(-1, d_in).astype(jnp.bfloat16).astype(jnp.float32)
    wT32 = fused.wT.astype(jnp.float32)
    aT32 = fused.aT.astype(jnp.float32)
    bT32 = fused.bT.astype(jnp.float32)
    ref_full = (jnp.matmul(x2, wT32, precision=hp) + fused.bias2
                + jnp.matmul(jnp.matmul(x2, aT32, precision=hp), bT32, precision=hp))
    ref_full = ref_full.reshape(batch, seq, -1)
    got_full = jnp.concatenate([outs[n] for n in model.names], axis=-1)
    assert got_full.shape == (batch, seq, 3 * d_out)
    assert got_full.dtype == jnp.float32
    assert bool(jnp.allclose(got_full, ref_full, rtol=1e-2, atol=1e-2))

    # ---- train mode: dropout mask generated in-kernel (no HBM noise tensor)
    model.train()
    outs_tr = jax.block_until_ready(model(x, seed=123))
    for name in model.names:
        v = outs_tr[name]
        assert v.shape == (batch, seq, d_out)
        assert bool(jnp.all(jnp.isfinite(v)))

    print("KERNEL_OK")
</pallas_src>

<mosaic_0001>
module attributes {stable_mosaic.version = 11 : i64} {
  func.func @_fused_lora_kernel(%arg0: i32, %arg1: i32, %arg2: i32, %arg3: memref<1xi32, #tpu.memory_space<smem>>, %arg4: memref<16x128xf32, #tpu.memory_space<vmem>>, %arg5: memref<128x384xbf16, #tpu.memory_space<vmem>>, %arg6: memref<1x384xf32, #tpu.memory_space<vmem>>, %arg7: memref<128x128xbf16, #tpu.memory_space<vmem>>, %arg8: memref<128x384xbf16, #tpu.memory_space<vmem>>, %arg9: memref<16x384xf32, #tpu.memory_space<vmem>>, %arg10: memref<16x128xf32, #tpu.memory_space<vmem>>) attributes {dimension_semantics = [#tpu.dimension_semantics<parallel>, #tpu.dimension_semantics<arbitrary>, #tpu.dimension_semantics<arbitrary>], iteration_bounds = array<i64: 1, 1, 1>, scalar_prefetch = 1 : i64, scratch_operands = 1 : i64, tpu.core_type = #tpu.core_type<tc>, window_params = [{transform_indices = @transform_0, window_bounds = array<i64: 16, 128>}, {transform_indices = @transform_1, window_bounds = array<i64: 128, 384>}, {transform_indices = @transform_2, window_bounds = array<i64: 1, 384>}, {transform_indices = @transform_3, window_bounds = array<i64: 128, 128>}, {transform_indices = @transform_4, window_bounds = array<i64: 128, 384>}, {transform_indices = @transform_5, window_bounds = array<i64: 16, 384>}]} {
    %c0_i32 = arith.constant 0 : i32
    %0 = arith.cmpi eq, %arg2, %c0_i32 : i32
    %1 = arith.extui %0 : i1 to i32
    %c0_i32_0 = arith.constant 0 : i32
    %2 = arith.cmpi ne, %1, %c0_i32_0 : i32
    scf.if %2 {
      %cst_15 = arith.constant 0.000000e+00 : f32
      %21 = vector.broadcast %cst_15 : f32 to vector<16x384xf32>
      %c0_16 = arith.constant 0 : index
      %c0_17 = arith.constant 0 : index
      %22 = vector.load %arg9[%c0_16, %c0_17] : memref<16x384xf32, #tpu.memory_space<vmem>>, vector<16x384xf32>
      tpu.vector_store %arg9[%c0_16, %c0_17], %21 {strides = array<i32>} : memref<16x384xf32, #tpu.memory_space<vmem>>, vector<16x384xf32>,
    } else {
    }
    %c0_i32_1 = arith.constant 0 : i32
    %3 = arith.cmpi eq, %arg1, %c0_i32_1 : i32
    %c0_i32_2 = arith.constant 0 : i32
    %4 = arith.cmpi eq, %arg2, %c0_i32_2 : i32
    %5 = arith.andi %3, %4 : i1
    %6 = arith.extui %5 : i1 to i32
    %c0_i32_3 = arith.constant 0 : i32
    %7 = arith.cmpi ne, %6, %c0_i32_3 : i32
    scf.if %7 {
      %cst_15 = arith.constant 0.000000e+00 : f32
      %21 = vector.broadcast %cst_15 : f32 to vector<16x128xf32>
      %c0_16 = arith.constant 0 : index
      %c0_17 = arith.constant 0 : index
      %22 = vector.load %arg10[%c0_16, %c0_17] : memref<16x128xf32, #tpu.memory_space<vmem>>, vector<16x128xf32>
      tpu.vector_store %arg10[%c0_16, %c0_17], %21 {strides = array<i32>} : memref<16x128xf32, #tpu.memory_space<vmem>>, vector<16x128xf32>,
    } else {
    }
    %c0 = arith.constant 0 : index
    %c0_4 = arith.constant 0 : index
    %8 = vector.load %arg4[%c0, %c0_4] : memref<16x128xf32, #tpu.memory_space<vmem>>, vector<16x128xf32>
    %9 = arith.truncf %8 : vector<16x128xf32> to vector<16x128xbf16>
    %c0_5 = arith.constant 0 : index
    %c0_6 = arith.constant 0 : index
    %10 = vector.load %arg9[%c0_5, %c0_6] : memref<16x384xf32, #tpu.memory_space<vmem>>, vector<16x384xf32>
    %c0_7 = arith.constant 0 : index
    %c0_8 = arith.constant 0 : index
    %11 = vector.load %arg5[%c0_7, %c0_8] : memref<128x384xbf16, #tpu.memory_space<vmem>>, vector<128x384xbf16>
    %cst = arith.constant dense<0.000000e+00> : vector<16x384xf32>
    %12 = tpu.matmul %9, %11, %cst {dimension_numbers = #tpu.dot_dimension_numbers<[1], [0], [0], [1], [0, 0, 1, 1], [], []>} : vector<16x128xbf16>, vector<128x384xbf16>, vector<16x384xf32> -> vector<16x384xf32>
    %13 = arith.addf %10, %12 : vector<16x384xf32>
    %c0_9 = arith.constant 0 : index
    %c0_10 = arith.constant 0 : index
    %14 = vector.load %arg9[%c0_9, %c0_10] : memref<16x384xf32, #tpu.memory_space<vmem>>, vector<16x384xf32>
    tpu.vector_store %arg9[%c0_9, %c0_10], %13 {strides = array<i32>} : memref<16x384xf32, #tpu.memory_space<vmem>>, vector<16x384xf32>,
    %c0_i32_11 = arith.constant 0 : i32
    %15 = arith.cmpi eq, %arg1, %c0_i32_11 : i32
    %16 = arith.extui %15 : i1 to i32
    %c0_i32_12 = arith.constant 0 : i32
    %17 = arith.cmpi ne, %16, %c0_i32_12 : i32
    scf.if %17 {
      %c0_15 = arith.constant 0 : index
      %c0_16 = arith.constant 0 : index
      %21 = vector.load %arg10[%c0_15, %c0_16] : memref<16x128xf32, #tpu.memory_space<vmem>>, vector<16x128xf32>
      %c0_17 = arith.constant 0 : index
      %c0_18 = arith.constant 0 : index
      %22 = vector.load %arg7[%c0_17, %c0_18] : memref<128x128xbf16, #tpu.memory_space<vmem>>, vector<128x128xbf16>
      %cst_19 = arith.constant dense<0.000000e+00> : vector<16x128xf32>
      %23 = tpu.matmul %9, %22, %cst_19 {dimension_numbers = #tpu.dot_dimension_numbers<[1], [0], [0], [1], [0, 0, 1, 1], [], []>} : vector<16x128xbf16>, vector<128x128xbf16>, vector<16x128xf32> -> vector<16x128xf32>
      %24 = arith.addf %21, %23 : vector<16x128xf32>
      %c0_20 = arith.constant 0 : index
      %c0_21 = arith.constant 0 : index
      %25 = vector.load %arg10[%c0_20, %c0_21] : memref<16x128xf32, #tpu.memory_space<vmem>>, vector<16x128xf32>
      tpu.vector_store %arg10[%c0_20, %c0_21], %24 {strides = array<i32>} : memref<16x128xf32, #tpu.memory_space<vmem>>, vector<16x128xf32>,
    } else {
    }
    %c0_i32_13 = arith.constant 0 : i32
    %18 = arith.cmpi eq, %arg2, %c0_i32_13 : i32
    %19 = arith.extui %18 : i1 to i32
    %c0_i32_14 = arith.constant 0 : i32
    %20 = arith.cmpi ne, %19, %c0_i32_14 : i32
    scf.if %20 {
      %c0_15 = arith.constant 0 : index
      %c0_16 = arith.constant 0 : index
      %21 = vector.load %arg10[%c0_15, %c0_16] : memref<16x128xf32, #tpu.memory_space<vmem>>, vector<16x128xf32>
      %22 = arith.truncf %21 : vector<16x128xf32> to vector<16x128xbf16>
      %c0_17 = arith.constant 0 : index
      %c0_18 = arith.constant 0 : index
      %23 = vector.load %arg8[%c0_17, %c0_18] : memref<128x384xbf16, #tpu.memory_space<vmem>>, vector<128x384xbf16>
      %cst_19 = arith.constant dense<0.000000e+00> : vector<16x384xf32>
      %24 = tpu.matmul %22, %23, %cst_19 {dimension_numbers = #tpu.dot_dimension_numbers<[1], [0], [0], [1], [0, 0, 1, 1], [], []>} : vector<16x128xbf16>, vector<128x384xbf16>, vector<16x384xf32> -> vector<16x384xf32>
      %c0_20 = arith.constant 0 : index
      %c0_21 = arith.constant 0 : index
      %25 = vector.load %arg9[%c0_20, %c0_21] : memref<16x384xf32, #tpu.memory_space<vmem>>, vector<16x384xf32>
      %c0_22 = arith.constant 0 : index
      %c0_23 = arith.constant 0 : index
      %26 = vector.load %arg6[%c0_22, %c0_23] : memref<1x384xf32, #tpu.memory_space<vmem>>, vector<1x384xf32>
      %27 = vector.broadcast %26 : vector<1x384xf32> to vector<16x384xf32>
      %28 = arith.addf %27, %24 : vector<16x384xf32>
      %29 = arith.addf %25, %28 : vector<16x384xf32>
      %c0_24 = arith.constant 0 : index
      %c0_25 = arith.constant 0 : index
      %30 = vector.load %arg9[%c0_24, %c0_25] : memref<16x384xf32, #tpu.memory_space<vmem>>, vector<16x384xf32>
      tpu.vector_store %arg9[%c0_24, %c0_25], %29 {strides = array<i32>} : memref<16x384xf32, #tpu.memory_space<vmem>>, vector<16x384xf32>,
    } else {
    }
    return
  }
  func.func @transform_0(%arg0: i32, %arg1: i32, %arg2: i32, %arg3: memref<1xi32, #tpu.memory_space<smem>>) -> (i32, i32) {
    %c0_i32 = arith.constant 0 : i32
    return %arg0, %arg2 : i32, i32
  }
  func.func @transform_1(%arg0: i32, %arg1: i32, %arg2: i32, %arg3: memref<1xi32, #tpu.memory_space<smem>>) -> (i32, i32) {
    %c0_i32 = arith.constant 0 : i32
    return %arg2, %arg1 : i32, i32
  }
  func.func @transform_2(%arg0: i32, %arg1: i32, %arg2: i32, %arg3: memref<1xi32, #tpu.memory_space<smem>>) -> (i32, i32) {
    %c0_i32 = arith.constant 0 : i32
    %c0_i32_0 = arith.constant 0 : i32
    return %c0_i32, %arg1 : i32, i32
  }
  func.func @transform_3(%arg0: i32, %arg1: i32, %arg2: i32, %arg3: memref<1xi32, #tpu.memory_space<smem>>) -> (i32, i32) {
    %c0_i32 = arith.constant 0 : i32
    %c0_i32_0 = arith.constant 0 : i32
    return %arg2, %c0_i32 : i32, i32
  }
  func.func @transform_4(%arg0: i32, %arg1: i32, %arg2: i32, %arg3: memref<1xi32, #tpu.memory_space<smem>>) -> (i32, i32) {
    %c0_i32 = arith.constant 0 : i32
    %c0_i32_0 = arith.constant 0 : i32
    return %c0_i32, %arg1 : i32, i32
  }
  func.func @transform_5(%arg0: i32, %arg1: i32, %arg2: i32, %arg3: memref<1xi32, #tpu.memory_space<smem>>) -> (i32, i32) {
    %c0_i32 = arith.constant 0 : i32
    return %arg0, %arg1 : i32, i32
  }
}

</mosaic_0001>

<llo_original>
// kernel: tpu_custom_call.1
$region0: #{tpu_custom_call.1}
  #allocation0 [shape = 'u32[]', space=smem, size = 0x4, offset = 0x4, fixed_abs, tag = 'smem constant byte address 0x4 - core index']
  #allocation1 [shape = 'u32[72,128]{1,0:T(1,128)}', space=vmem, size = 0x9000, scoped, tag = 'internal scratch']
  #allocation2 [shape = 'f32[16,128]{1,0:T(8,128)}', space=vmem, size = 0x2000, scoped, tag = 'scratch operand']
  #allocation3 [shape = 's32[1]{0}', space=sflag, size = 0x4, scoped, tag = 'scoped memory for tpu_custom_call.1']
  #allocation4 [shape = 's32[1]{0:T(128)S(6)}', space=smem, size = 0x200, scoped, tag = 'prefetched SMEM operand 0']
  %s0 = inlined_call_operand.<no memory space> [shape: s32[1], index: 0, kind: input, shape index: {}]
  %s1 = inlined_call_operand.hbm [shape: f32[16,128], index: 1, kind: input, shape index: {}]
  %s2 = inlined_call_operand.hbm [shape: bf16[128,384], index: 2, kind: input, shape index: {}]
  %s3 = inlined_call_operand.vmem [shape: f32[1,384], index: 3, kind: input, shape index: {}]
  %s4 = inlined_call_operand.hbm [shape: bf16[128,128], index: 4, kind: input, shape index: {}]
  %s5 = inlined_call_operand.hbm [shape: bf16[128,384], index: 5, kind: input, shape index: {}]
  %s6 = inlined_call_operand.hbm [shape: f32[16,384], index: 6, kind: output, shape index: {}]
  %s7 = sld [smem:[#allocation0]]
  $region62: #{tpu_custom_call.1} parent=0
    _
  %s9 = ssub.s32 1, %s7
  %s10 = scalar_select 0, %s9, %s7
  %11 = sst [smem:[#allocation4]] %s0
  $region1: #{tpu_custom_call.1} parent=0
    #allocation5 [shape = 'u8[8192]{0}', space=vmem, size = 0x2000, scoped, tag = 'input window, operand 1, single buffered']
    #allocation6 [shape = 's32[1]{0}', space=sflag, size = 0x4, scoped, tag = 'scoped memory for tpu_custom_call.1']
    #allocation7 [shape = 's32[1]{0}', space=sflag, size = 0x4, scoped, tag = 'scoped memory for tpu_custom_call.1']
    #allocation8 [shape = 'u8[98304]{0}', space=vmem, size = 0x18000, scoped, tag = 'input window, operand 2, single buffered']
    #allocation9 [shape = 's32[1]{0}', space=sflag, size = 0x4, scoped, tag = 'scoped memory for tpu_custom_call.1']
    #allocation10 [shape = 'u8[32768]{0}', space=vmem, size = 0x8000, scoped, tag = 'input window, operand 4, single buffered']
    #allocation11 [shape = 'u8[98304]{0}', space=vmem, size = 0x18000, scoped, tag = 'input window, operand 5, single buffered']
    #allocation12 [shape = 's32[1]{0}', space=sflag, size = 0x4, scoped, tag = 'scoped memory for tpu_custom_call.1']
    #allocation13 [shape = 'u8[24576]{0}', space=vmem, size = 0x6000, scoped, tag = 'output window, operand 0, single buffered']
    %12 = vsyncpa [#allocation6], 0
    %13 = vsyncpa [#allocation9], 0
    %14 = vsyncpa [#allocation12], 0
    %15 = vsyncpa [#allocation7], 0
    // Predicated region
    $region2: #{tpu_custom_call.1} parent=1 // pred_check
      _
    $region3: #{tpu_custom_call.1} parent=1 // pred_check_branch
      %17 = sbr.rel (0) target = $region5
    $region4: #{tpu_custom_call.1} parent=1 // pred_region
      %19 = vsyncadd [#allocation6], 0
      %s20 = sshll.u32 %s1, 4
      %s21 = int_to_ptr.hbm [resolvable:$true] %s20
      %s22 = sshll.u32 [#allocation5], 4
      %s23 = int_to_ptr.vmem [resolvable:$true] %s22
      %28 = dma.hbm_to_vmem [thread:$0]  %s21, 256, %s23, [#allocation6], 128, 128, 8
    $region5: #{tpu_custom_call.1} parent=1 // pred_fallthru
      _
    // Predicated region
    $region6: #{tpu_custom_call.1} parent=1 // pred_check
      _
    $region7: #{tpu_custom_call.1} parent=1 // pred_check_branch
      %30 = sbr.rel (0) target = $region9
    $region8: #{tpu_custom_call.1} parent=1 // pred_region
      %32 = vsyncadd [#allocation9], 0
      %s33 = sshll.u32 %s2, 4
      %s34 = int_to_ptr.hbm [resolvable:$true] %s33
      %s35 = sshll.u32 [#allocation8], 4
      %s36 = int_to_ptr.vmem [resolvable:$true] %s35
      %41 = dma.hbm_to_vmem [thread:$0]  %s34, 3072, %s36, [#allocation9], 192, 192, 12
    $region9: #{tpu_custom_call.1} parent=1 // pred_fallthru
      _
    // Predicated region
    $region10: #{tpu_custom_call.1} parent=1 // pred_check
      _
    $region11: #{tpu_custom_call.1} parent=1 // pred_check_branch
      %43 = sbr.rel (0) target = $region13
    $region12: #{tpu_custom_call.1} parent=1 // pred_region
      _
    $region13: #{tpu_custom_call.1} parent=1 // pred_fallthru
      _
    // Predicated region
    $region14: #{tpu_custom_call.1} parent=1 // pred_check
      _
    $region15: #{tpu_custom_call.1} parent=1 // pred_check_branch
      %45 = sbr.rel (0) target = $region17
    $region16: #{tpu_custom_call.1} parent=1 // pred_region
      %47 = vsyncadd [#allocation9], 0
      %s48 = sshll.u32 %s4, 4
      %s49 = int_to_ptr.hbm [resolvable:$true] %s48
      %s50 = sshll.u32 [#allocation10], 4
      %s51 = int_to_ptr.vmem [resolvable:$true] %s50
      %56 = dma.hbm_to_vmem [thread:$0]  %s49, 1024, %s51, [#allocation9], 64, 64, 4
    $region17: #{tpu_custom_call.1} parent=1 // pred_fallthru
      _
    // Predicated region
    $region18: #{tpu_custom_call.1} parent=1 // pred_check
      _
    $region19: #{tpu_custom_call.1} parent=1 // pred_check_branch
      %58 = sbr.rel (0) target = $region21
    $region20: #{tpu_custom_call.1} parent=1 // pred_region
      %60 = vsyncadd [#allocation12], 0
      %s61 = sshll.u32 %s5, 4
      %s62 = int_to_ptr.hbm [resolvable:$true] %s61
      %s63 = sshll.u32 [#allocation11], 4
      %s64 = int_to_ptr.vmem [resolvable:$true] %s63
      %69 = dma.hbm_to_vmem [thread:$0]  %s62, 3072, %s64, [#allocation12], 192, 192, 12
    $region21: #{tpu_custom_call.1} parent=1 // pred_fallthru
      _
    // Predicated region
    $region22: #{tpu_custom_call.1} parent=1 // pred_check
      _
    $region23: #{tpu_custom_call.1} parent=1 // pred_check_branch
      %71 = sbr.rel (0) target = $region25
    $region24: #{tpu_custom_call.1} parent=1 // pred_region
      %73 = dma.done [#allocation6], 256
    $region25: #{tpu_custom_call.1} parent=1 // pred_fallthru
      _
    // Predicated region
    $region26: #{tpu_custom_call.1} parent=1 // pred_check
      _
    $region27: #{tpu_custom_call.1} parent=1 // pred_check_branch
      %75 = sbr.rel (0) target = $region29
    $region28: #{tpu_custom_call.1} parent=1 // pred_region
      %77 = dma.done [#allocation9], 3072
    $region29: #{tpu_custom_call.1} parent=1 // pred_fallthru
      _
    // Predicated region
    $region30: #{tpu_custom_call.1} parent=1 // pred_check
      _
    $region31: #{tpu_custom_call.1} parent=1 // pred_check_branch
      %79 = sbr.rel (0) target = $region33
    $region32: #{tpu_custom_call.1} parent=1 // pred_region
      %81 = dma.done [#allocation9], 1024
    $region33: #{tpu_custom_call.1} parent=1 // pred_fallthru
      _
    // Predicated region
    $region34: #{tpu_custom_call.1} parent=1 // pred_check
      _
    $region35: #{tpu_custom_call.1} parent=1 // pred_check_branch
      %83 = sbr.rel (0) target = $region37
    $region36: #{tpu_custom_call.1} parent=1 // pred_region
      %85 = dma.done [#allocation12], 3072
    $region37: #{tpu_custom_call.1} parent=1 // pred_fallthru
      _
    %p86 = scmp.eq.s32.totalorder 0, 0
    // Predicated region
    $region38: #{tpu_custom_call.1} parent=1 // pred_check
      %p87 = pneg %p86
    $region39: #{tpu_custom_call.1} parent=1 // pred_check_branch
      %89 = sbr.rel (%p87) target = $region41
    $region40: #{tpu_custom_call.1} parent=1 // pred_region
      %90 = vst [vmem:[#allocation13] sm:$0xff] 0.0
      %91 = vst [vmem:[#allocation13 + $0x8] sm:$0xff] 0.0
      %92 = vst [vmem:[#allocation13 + $0x10] sm:$0xff] 0.0
      %93 = vst [vmem:[#allocation13 + $0x18] sm:$0xff] 0.0
      %94 = vst [vmem:[#allocation13 + $0x20] sm:$0xff] 0.0
      %95 = vst [vmem:[#allocation13 + $0x28] sm:$0xff] 0.0
    $region41: #{tpu_custom_call.1} parent=1 // pred_fallthru
      _
    %p96 = scmp.eq.s32.totalorder 0, 0
    %p97 = pnand %p96, %p86
    %p98 = pneg %p97
    // Predicated region
    $region42: #{tpu_custom_call.1} parent=1 // pred_check
      _
    $region43: #{tpu_custom_call.1} parent=1 // pred_check_branch
      %100 = sbr.rel (%p97) target = $region45
    $region44: #{tpu_custom_call.1} parent=1 // pred_region
      %101 = vst [vmem:[#allocation2] sm:$0xff] 0.0
      %102 = vst [vmem:[#allocation2 + $0x8] sm:$0xff] 0.0
    $region45: #{tpu_custom_call.1} parent=1 // pred_fallthru
      _
    %v103 = vld [vmem:[#allocation5] sm:$0xff]
    %v104 = vld [vmem:[#allocation5 + $0x8] sm:$0xff]
    %v105 = vpack.c.bf16 %v104, %v103
    %v106 = vld [vmem:[#allocation13] sm:$0xff]
    %v107 = vld [vmem:[#allocation13 + $0x8] sm:$0xff]
    %v108 = vld [vmem:[#allocation13 + $0x10] sm:$0xff]
    %v109 = vld [vmem:[#allocation13 + $0x18] sm:$0xff]
    %v110 = vld [vmem:[#allocation13 + $0x20] sm:$0xff]
    %v111 = vld [vmem:[#allocation13 + $0x28] sm:$0xff]
    %v112 = vld [vmem:[#allocation8] sm:$0xff]
    %v113 = vld [vmem:[#allocation8 + $0x8] sm:$0xf]
    %v114 = vld [vmem:[#allocation8 + $0xc] sm:$0xff]
    %v115 = vld [vmem:[#allocation8 + $0x14] sm:$0xf]
    %v116 = vld [vmem:[#allocation8 + $0x18] sm:$0xff]
    %v117 = vld [vmem:[#allocation8 + $0x20] sm:$0xf]
    %v118 = vld [vmem:[#allocation8 + $0x24] sm:$0xff]
    %v119 = vld [vmem:[#allocation8 + $0x2c] sm:$0xf]
    %v120 = vld [vmem:[#allocation8 + $0x30] sm:$0xff]
    %v121 = vld [vmem:[#allocation8 + $0x38] sm:$0xf]
    %v122 = vld [vmem:[#allocation8 + $0x3c] sm:$0xff]
    %v123 = vld [vmem:[#allocation8 + $0x44] sm:$0xf]
    %v124 = vld [vmem:[#allocation8 + $0x48] sm:$0xff]
    %v125 = vld [vmem:[#allocation8 + $0x50] sm:$0xf]
    %v126 = vld [vmem:[#allocation8 + $0x54] sm:$0xff]
    %v127 = vld [vmem:[#allocation8 + $0x5c] sm:$0xf]
    %v128 = vld [vmem:[#allocation8 + $0x60] sm:$0xff]
    %v129 = vld [vmem:[#allocation8 + $0x68] sm:$0xf]
    %v130 = vld [vmem:[#allocation8 + $0x6c] sm:$0xff]
    %v131 = vld [vmem:[#allocation8 + $0x74] sm:$0xf]
    %v132 = vld [vmem:[#allocation8 + $0x78] sm:$0xff]
    %v133 = vld [vmem:[#allocation8 + $0x80] sm:$0xf]
    %v134 = vld [vmem:[#allocation8 + $0x84] sm:$0xff]
    %v135 = vld [vmem:[#allocation8 + $0x8c] sm:$0xf]
    %v136 = vld [vmem:[#allocation8 + $0x90] sm:$0xff]
    %v137 = vld [vmem:[#allocation8 + $0x98] sm:$0xf]
    %v138 = vld [vmem:[#allocation8 + $0x9c] sm:$0xff]
    %v139 = vld [vmem:[#allocation8 + $0xa4] sm:$0xf]
    %v140 = vld [vmem:[#allocation8 + $0xa8] sm:$0xff]
    %v141 = vld [vmem:[#allocation8 + $0xb0] sm:$0xf]
    %v142 = vld [vmem:[#allocation8 + $0xb4] sm:$0xff]
    %v143 = vld [vmem:[#allocation8 + $0xbc] sm:$0xf]
    %v176 = vunpack.c.l.b16 %v112
    %v177 = vunpack.c.h.b16 %v112
    %v178 = vunpack.c.l.b16 %v113
    %v179 = vunpack.c.l.b16 %v114
    %v180 = vunpack.c.h.b16 %v114
    %v181 = vunpack.c.l.b16 %v115
    %v182 = vunpack.c.l.b16 %v116
    %v183 = vunpack.c.h.b16 %v116
    %v184 = vunpack.c.l.b16 %v117
    %v185 = vunpack.c.l.b16 %v118
    %v186 = vunpack.c.h.b16 %v118
    %v187 = vunpack.c.l.b16 %v119
    %v188 = vunpack.c.l.b16 %v120
    %v189 = vunpack.c.h.b16 %v120
    %v190 = vunpack.c.l.b16 %v121
    %v191 = vunpack.c.l.b16 %v122
    %v192 = vunpack.c.h.b16 %v122
    %v193 = vunpack.c.l.b16 %v123
    %v194 = vunpack.c.l.b16 %v124
    %v195 = vunpack.c.h.b16 %v124
    %v196 = vunpack.c.l.b16 %v125
    %v197 = vunpack.c.l.b16 %v126
    %v198 = vunpack.c.h.b16 %v126
    %v199 = vunpack.c.l.b16 %v127
    %v200 = vunpack.c.l.b16 %v128
    %v201 = vunpack.c.h.b16 %v128
    %v202 = vunpack.c.l.b16 %v129
    %v203 = vunpack.c.l.b16 %v130
    %v204 = vunpack.c.h.b16 %v130
    %v205 = vunpack.c.l.b16 %v131
    %v206 = vunpack.c.l.b16 %v132
    %v207 = vunpack.c.h.b16 %v132
    %v208 = vunpack.c.l.b16 %v133
    %v209 = vunpack.c.l.b16 %v134
    %v210 = vunpack.c.h.b16 %v134
    %v211 = vunpack.c.l.b16 %v135
    %v212 = vunpack.c.l.b16 %v136
    %v213 = vunpack.c.h.b16 %v136
    %v214 = vunpack.c.l.b16 %v137
    %v215 = vunpack.c.l.b16 %v138
    %v216 = vunpack.c.h.b16 %v138
    %v217 = vunpack.c.l.b16 %v139
    %v218 = vunpack.c.l.b16 %v140
    %v219 = vunpack.c.h.b16 %v140
    %v220 = vunpack.c.l.b16 %v141
    %v221 = vunpack.c.l.b16 %v142
    %v222 = vunpack.c.h.b16 %v142
    %v223 = vunpack.c.l.b16 %v143
    %v224 = vpack.c.b16 %v179, %v176
    %v225 = vpack.c.b16 %v180, %v177
    %v226 = vpack.c.b16 %v181, %v178
    %v227 = vpack.c.b16 %v185, %v182
    %v228 = vpack.c.b16 %v186, %v183
    %v229 = vpack.c.b16 %v187, %v184
    %v230 = vpack.c.b16 %v191, %v188
    %v231 = vpack.c.b16 %v192, %v189
    %v232 = vpack.c.b16 %v193, %v190
    %v233 = vpack.c.b16 %v197, %v194
    %v234 = vpack.c.b16 %v198, %v195
    %v235 = vpack.c.b16 %v199, %v196
    %v236 = vpack.c.b16 %v203, %v200
    %v237 = vpack.c.b16 %v204, %v201
    %v238 = vpack.c.b16 %v205, %v202
    %v239 = vpack.c.b16 %v209, %v206
    %v240 = vpack.c.b16 %v210, %v207
    %v241 = vpack.c.b16 %v211, %v208
    %v242 = vpack.c.b16 %v215, %v212
    %v243 = vpack.c.b16 %v216, %v213
    %v244 = vpack.c.b16 %v217, %v214
    %v245 = vpack.c.b16 %v221, %v218
    %v246 = vpack.c.b16 %v222, %v219
    %v247 = vpack.c.b16 %v223, %v220
    %272 = vmatpush.bf16.msra.mxu0 %v245
    %273 = vmatpush.bf16.msra.mxu0 %v242
    %274 = vmatpush.bf16.msra.mxu0 %v239
    %275 = vmatpush.bf16.msra.mxu0 %v236
    %276 = vmatpush.bf16.msra.mxu0 %v233
    %277 = vmatpush.bf16.msra.mxu0 %v230
    %278 = vmatpush.bf16.msra.mxu0 %v227
    %279 = vmatpush.bf16.msra.mxu0 %v224
    %280 = vmatmul.bf16.gmra.mxu0 %v105
    %v281 = vpop.f32.mrf.mxu0
    %v282 = vadd.f32 0.0, %v281
    %v283 = vpop.f32.mrf.mxu0
    %v284 = vadd.f32 0.0, %v283
    %285 = vdwg.mxu0
    %286 = vmatpush.bf16.msra.mxu0 %v246
    %287 = vmatpush.bf16.msra.mxu0 %v243
    %288 = vmatpush.bf16.msra.mxu0 %v240
    %289 = vmatpush.bf16.msra.mxu0 %v237
    %290 = vmatpush.bf16.msra.mxu0 %v234
    %291 = vmatpush.bf16.msra.mxu0 %v231
    %292 = vmatpush.bf16.msra.mxu0 %v228
    %293 = vmatpush.bf16.msra.mxu0 %v225
    %294 = vmatmul.bf16.gmra.mxu0 %v105
    %v295 = vpop.f32.mrf.mxu0
    %v296 = vadd.f32 0.0, %v295
    %v297 = vpop.f32.mrf.mxu0
    %v298 = vadd.f32 0.0, %v297
    %299 = vdwg.mxu0
    %300 = vmatpush.bf16.msra.mxu0 %v247
    %301 = vmatpush.bf16.msra.mxu0 %v244
    %302 = vmatpush.bf16.msra.mxu0 %v241
    %303 = vmatpush.bf16.msra.mxu0 %v238
    %304 = vmatpush.bf16.msra.mxu0 %v235
    %305 = vmatpush.bf16.msra.mxu0 %v232
    %306 = vmatpush.bf16.msra.mxu0 %v229
    %307 = vmatpush.bf16.msra.mxu0 %v226
    %308 = vmatmul.bf16.gmra.mxu0 %v105
    %v309 = vpop.f32.mrf.mxu0
    %v310 = vadd.f32 0.0, %v309
    %v311 = vpop.f32.mrf.mxu0
    %v312 = vadd.f32 0.0, %v311
    %313 = vdwg.mxu0
    %v314 = vadd.f32 %v106, %v282
    %v315 = vadd.f32 %v107, %v296
    %v316 = vadd.f32 %v108, %v310
    %v317 = vadd.f32 %v109, %v284
    %v318 = vadd.f32 %v110, %v298
    %v319 = vadd.f32 %v111, %v312
    %320 = vst [vmem:[#allocation13] sm:$0xff] %v314
    %321 = vst [vmem:[#allocation13 + $0x8] sm:$0xff] %v315
    %322 = vst [vmem:[#allocation13 + $0x10] sm:$0xff] %v316
    %323 = vst [vmem:[#allocation13 + $0x18] sm:$0xff] %v317
    %324 = vst [vmem:[#allocation13 + $0x20] sm:$0xff] %v318
    %325 = vst [vmem:[#allocation13 + $0x28] sm:$0xff] %v319
    // Predicated region
    $region46: #{tpu_custom_call.1} parent=1 // pred_check
      %p326 = pneg %p96
    $region47: #{tpu_custom_call.1} parent=1 // pred_check_branch
      %328 = sbr.rel (%p326) target = $region49
    $region48: #{tpu_custom_call.1} parent=1 // pred_region
      %v329 = vld [vmem:[#allocation2] sm:$0xff]
      %v330 = vld [vmem:[#allocation2 + $0x8] sm:$0xff]
      %v331 = vld [vmem:[#allocation10] sm:$0xf]
      %v332 = vld [vmem:[#allocation10 + $0x4] sm:$0xf]
      %v333 = vld [vmem:[#allocation10 + $0x8] sm:$0xf]
      %v334 = vld [vmem:[#allocation10 + $0xc] sm:$0xf]
      %v335 = vld [vmem:[#allocation10 + $0x10] sm:$0xf]
      %v336 = vld [vmem:[#allocation10 + $0x14] sm:$0xf]
      %v337 = vld [vmem:[#allocation10 + $0x18] sm:$0xf]
      %v338 = vld [vmem:[#allocation10 + $0x1c] sm:$0xf]
      %v339 = vld [vmem:[#allocation10 + $0x20] sm:$0xf]
      %v340 = vld [vmem:[#allocation10 + $0x24] sm:$0xf]
      %v341 = vld [vmem:[#allocation10 + $0x28] sm:$0xf]
      %v342 = vld [vmem:[#allocation10 + $0x2c] sm:$0xf]
      %v343 = vld [vmem:[#allocation10 + $0x30] sm:$0xf]
      %v344 = vld [vmem:[#allocation10 + $0x34] sm:$0xf]
      %v345 = vld [vmem:[#allocation10 + $0x38] sm:$0xf]
      %v346 = vld [vmem:[#allocation10 + $0x3c] sm:$0xf]
      %v363 = vunpack.c.l.b16 %v331
      %v364 = vunpack.c.l.b16 %v332
      %v365 = vunpack.c.l.b16 %v333
      %v366 = vunpack.c.l.b16 %v334
      %v367 = vunpack.c.l.b16 %v335
      %v368 = vunpack.c.l.b16 %v336
      %v369 = vunpack.c.l.b16 %v337
      %v370 = vunpack.c.l.b16 %v338
      %v371 = vunpack.c.l.b16 %v339
      %v372 = vunpack.c.l.b16 %v340
      %v373 = vunpack.c.l.b16 %v341
      %v374 = vunpack.c.l.b16 %v342
      %v375 = vunpack.c.l.b16 %v343
      %v376 = vunpack.c.l.b16 %v344
      %v377 = vunpack.c.l.b16 %v345
      %v378 = vunpack.c.l.b16 %v346
      %v379 = vpack.c.b16 %v364, %v363
      %v380 = vpack.c.b16 %v366, %v365
      %v381 = vpack.c.b16 %v368, %v367
      %v382 = vpack.c.b16 %v370, %v369
      %v383 = vpack.c.b16 %v372, %v371
      %v384 = vpack.c.b16 %v374, %v373
      %v385 = vpack.c.b16 %v376, %v375
      %v386 = vpack.c.b16 %v378, %v377
      %395 = vmatpush.bf16.msra.mxu0 %v386
      %396 = vmatpush.bf16.msra.mxu0 %v385
      %397 = vmatpush.bf16.msra.mxu0 %v384
      %398 = vmatpush.bf16.msra.mxu0 %v383
      %399 = vmatpush.bf16.msra.mxu0 %v382
      %400 = vmatpush.bf16.msra.mxu0 %v381
      %401 = vmatpush.bf16.msra.mxu0 %v380
      %402 = vmatpush.bf16.msra.mxu0 %v379
      %403 = vmatmul.bf16.gmra.mxu0 %v105
      %v404 = vpop.f32.mrf.mxu0
      %v405 = vadd.f32 0.0, %v404
      %v406 = vpop.f32.mrf.mxu0
      %v407 = vadd.f32 0.0, %v406
      %408 = vdwg.mxu0
      %v409 = vadd.f32 %v329, %v405
      %v410 = vadd.f32 %v330, %v407
      %411 = vst [vmem:[#allocation2] sm:$0xff] %v409
      %412 = vst [vmem:[#allocation2 + $0x8] sm:$0xff] %v410
    $region49: #{tpu_custom_call.1} parent=1 // pred_fallthru
      _
    // Predicated region
    $region50: #{tpu_custom_call.1} parent=1 // pred_check
      %p413 = pneg %p86
    $region51: #{tpu_custom_call.1} parent=1 // pred_check_branch
      %415 = sbr.rel (%p413) target = $region53
    $region52: #{tpu_custom_call.1} parent=1 // pred_region
      %v416 = vld [vmem:[#allocation2] sm:$0xff]
      %v417 = vld [vmem:[#allocation2 + $0x8] sm:$0xff]
      %v418 = vpack.c.bf16 %v417, %v416
      %v419 = vld [vmem:[#allocation11] sm:$0xff]
      %v420 = vld [vmem:[#allocation11 + $0x8] sm:$0xf]
      %v421 = vld [vmem:[#allocation11 + $0xc] sm:$0xff]
      %v422 = vld [vmem:[#allocation11 + $0x14] sm:$0xf]
      %v423 = vld [vmem:[#allocation11 + $0x18] sm:$0xff]
      %v424 = vld [vmem:[#allocation11 + $0x20] sm:$0xf]
      %v425 = vld [vmem:[#allocation11 + $0x24] sm:$0xff]
      %v426 = vld [vmem:[#allocation11 + $0x2c] sm:$0xf]
      %v427 = vld [vmem:[#allocation11 + $0x30] sm:$0xff]
      %v428 = vld [vmem:[#allocation11 + $0x38] sm:$0xf]
      %v429 = vld [vmem:[#allocation11 + $0x3c] sm:$0xff]
      %v430 = vld [vmem:[#allocation11 + $0x44] sm:$0xf]
      %v431 = vld [vmem:[#allocation11 + $0x48] sm:$0xff]
      %v432 = vld [vmem:[#allocation11 + $0x50] sm:$0xf]
      %v433 = vld [vmem:[#allocation11 + $0x54] sm:$0xff]
      %v434 = vld [vmem:[#allocation11 + $0x5c] sm:$0xf]
      %v435 = vld [vmem:[#allocation11 + $0x60] sm:$0xff]
      %v436 = vld [vmem:[#allocation11 + $0x68] sm:$0xf]
      %v437 = vld [vmem:[#allocation11 + $0x6c] sm:$0xff]
      %v438 = vld [vmem:[#allocation11 + $0x74] sm:$0xf]
      %v439 = vld [vmem:[#allocation11 + $0x78] sm:$0xff]
      %v440 = vld [vmem:[#allocation11 + $0x80] sm:$0xf]
      %v441 = vld [vmem:[#allocation11 + $0x84] sm:$0xff]
      %v442 = vld [vmem:[#allocation11 + $0x8c] sm:$0xf]
      %v443 = vld [vmem:[#allocation11 + $0x90] sm:$0xff]
      %v444 = vld [vmem:[#allocation11 + $0x98] sm:$0xf]
      %v445 = vld [vmem:[#allocation11 + $0x9c] sm:$0xff]
      %v446 = vld [vmem:[#allocation11 + $0xa4] sm:$0xf]
      %v447 = vld [vmem:[#allocation11 + $0xa8] sm:$0xff]
      %v448 = vld [vmem:[#allocation11 + $0xb0] sm:$0xf]
      %v449 = vld [vmem:[#allocation11 + $0xb4] sm:$0xff]
      %v450 = vld [vmem:[#allocation11 + $0xbc] sm:$0xf]
      %v483 = vunpack.c.l.b16 %v419
      %v484 = vunpack.c.h.b16 %v419
      %v485 = vunpack.c.l.b16 %v420
      %v486 = vunpack.c.l.b16 %v421
      %v487 = vunpack.c.h.b16 %v421
      %v488 = vunpack.c.l.b16 %v422
      %v489 = vunpack.c.l.b16 %v423
      %v490 = vunpack.c.h.b16 %v423
      %v491 = vunpack.c.l.b16 %v424
      %v492 = vunpack.c.l.b16 %v425
      %v493 = vunpack.c.h.b16 %v425
      %v494 = vunpack.c.l.b16 %v426
      %v495 = vunpack.c.l.b16 %v427
      %v496 = vunpack.c.h.b16 %v427
      %v497 = vunpack.c.l.b16 %v428
      %v498 = vunpack.c.l.b16 %v429
      %v499 = vunpack.c.h.b16 %v429
      %v500 = vunpack.c.l.b16 %v430
      %v501 = vunpack.c.l.b16 %v431
      %v502 = vunpack.c.h.b16 %v431
      %v503 = vunpack.c.l.b16 %v432
      %v504 = vunpack.c.l.b16 %v433
      %v505 = vunpack.c.h.b16 %v433
      %v506 = vunpack.c.l.b16 %v434
      %v507 = vunpack.c.l.b16 %v435
      %v508 = vunpack.c.h.b16 %v435
      %v509 = vunpack.c.l.b16 %v436
      %v510 = vunpack.c.l.b16 %v437
      %v511 = vunpack.c.h.b16 %v437
      %v512 = vunpack.c.l.b16 %v438
      %v513 = vunpack.c.l.b16 %v439
      %v514 = vunpack.c.h.b16 %v439
      %v515 = vunpack.c.l.b16 %v440
      %v516 = vunpack.c.l.b16 %v441
      %v517 = vunpack.c.h.b16 %v441
      %v518 = vunpack.c.l.b16 %v442
      %v519 = vunpack.c.l.b16 %v443
      %v520 = vunpack.c.h.b16 %v443
      %v521 = vunpack.c.l.b16 %v444
      %v522 = vunpack.c.l.b16 %v445
      %v523 = vunpack.c.h.b16 %v445
      %v524 = vunpack.c.l.b16 %v446
      %v525 = vunpack.c.l.b16 %v447
      %v526 = vunpack.c.h.b16 %v447
      %v527 = vunpack.c.l.b16 %v448
      %v528 = vunpack.c.l.b16 %v449
      %v529 = vunpack.c.h.b16 %v449
      %v530 = vunpack.c.l.b16 %v450
      %v531 = vpack.c.b16 %v486, %v483
      %v532 = vpack.c.b16 %v487, %v484
      %v533 = vpack.c.b16 %v488, %v485
      %v534 = vpack.c.b16 %v492, %v489
      %v535 = vpack.c.b16 %v493, %v490
      %v536 = vpack.c.b16 %v494, %v491
      %v537 = vpack.c.b16 %v498, %v495
      %v538 = vpack.c.b16 %v499, %v496
      %v539 = vpack.c.b16 %v500, %v497
      %v540 = vpack.c.b16 %v504, %v501
      %v541 = vpack.c.b16 %v505, %v502
      %v542 = vpack.c.b16 %v506, %v503
      %v543 = vpack.c.b16 %v510, %v507
      %v544 = vpack.c.b16 %v511, %v508
      %v545 = vpack.c.b16 %v512, %v509
      %v546 = vpack.c.b16 %v516, %v513
      %v547 = vpack.c.b16 %v517, %v514
      %v548 = vpack.c.b16 %v518, %v515
      %v549 = vpack.c.b16 %v522, %v519
      %v550 = vpack.c.b16 %v523, %v520
      %v551 = vpack.c.b16 %v524, %v521
      %v552 = vpack.c.b16 %v528, %v525
      %v553 = vpack.c.b16 %v529, %v526
      %v554 = vpack.c.b16 %v530, %v527
      %579 = vmatpush.bf16.msra.mxu0 %v552
      %580 = vmatpush.bf16.msra.mxu0 %v549
      %581 = vmatpush.bf16.msra.mxu0 %v546
      %582 = vmatpush.bf16.msra.mxu0 %v543
      %583 = vmatpush.bf16.msra.mxu0 %v540
      %584 = vmatpush.bf16.msra.mxu0 %v537
      %585 = vmatpush.bf16.msra.mxu0 %v534
      %586 = vmatpush.bf16.msra.mxu0 %v531
      %587 = vmatmul.bf16.gmra.mxu0 %v418
      %v588 = vpop.f32.mrf.mxu0
      %v589 = vadd.f32 0.0, %v588
      %v590 = vpop.f32.mrf.mxu0
      %v591 = vadd.f32 0.0, %v590
      %592 = vdwg.mxu0
      %593 = vmatpush.bf16.msra.mxu0 %v553
      %594 = vmatpush.bf16.msra.mxu0 %v550
      %595 = vmatpush.bf16.msra.mxu0 %v547
      %596 = vmatpush.bf16.msra.mxu0 %v544
      %597 = vmatpush.bf16.msra.mxu0 %v541
      %598 = vmatpush.bf16.msra.mxu0 %v538
      %599 = vmatpush.bf16.msra.mxu0 %v535
      %600 = vmatpush.bf16.msra.mxu0 %v532
      %601 = vmatmul.bf16.gmra.mxu0 %v418
      %v602 = vpop.f32.mrf.mxu0
      %v603 = vadd.f32 0.0, %v602
      %v604 = vpop.f32.mrf.mxu0
      %v605 = vadd.f32 0.0, %v604
      %606 = vdwg.mxu0
      %607 = vmatpush.bf16.msra.mxu0 %v554
      %608 = vmatpush.bf16.msra.mxu0 %v551
      %609 = vmatpush.bf16.msra.mxu0 %v548
      %610 = vmatpush.bf16.msra.mxu0 %v545
      %611 = vmatpush.bf16.msra.mxu0 %v542
      %612 = vmatpush.bf16.msra.mxu0 %v539
      %613 = vmatpush.bf16.msra.mxu0 %v536
      %614 = vmatpush.bf16.msra.mxu0 %v533
      %615 = vmatmul.bf16.gmra.mxu0 %v418
      %v616 = vpop.f32.mrf.mxu0
      %v617 = vadd.f32 0.0, %v616
      %v618 = vpop.f32.mrf.mxu0
      %v619 = vadd.f32 0.0, %v618
      %620 = vdwg.mxu0
      %v621 = vld [vmem:[#allocation13] sm:$0xff]
      %v622 = vld [vmem:[#allocation13 + $0x8] sm:$0xff]
      %v623 = vld [vmem:[#allocation13 + $0x10] sm:$0xff]
      %v624 = vld [vmem:[#allocation13 + $0x18] sm:$0xff]
      %v625 = vld [vmem:[#allocation13 + $0x20] sm:$0xff]
      %v626 = vld [vmem:[#allocation13 + $0x28] sm:$0xff]
      %v627 = vld [vmem:[%s3] sm:$0x7]
      %v629 = vperm.slane %v627, 0
      %v630 = vperm.slane %v627, 1
      %v631 = vperm.slane %v627, 2
      %v635 = vadd.f32 %v629, %v589
      %v636 = vadd.f32 %v630, %v603
      %v637 = vadd.f32 %v631, %v617
      %v638 = vadd.f32 %v629, %v591
      %v639 = vadd.f32 %v630, %v605
      %v640 = vadd.f32 %v631, %v619
      %v641 = vadd.f32 %v621, %v635
      %v642 = vadd.f32 %v622, %v636
      %v643 = vadd.f32 %v623, %v637
      %v644 = vadd.f32 %v624, %v638
      %v645 = vadd.f32 %v625, %v639
      %v646 = vadd.f32 %v626, %v640
      %647 = vst [vmem:[#allocation13] sm:$0xff] %v641
      %648 = vst [vmem:[#allocation13 + $0x8] sm:$0xff] %v642
      %649 = vst [vmem:[#allocation13 + $0x10] sm:$0xff] %v643
      %650 = vst [vmem:[#allocation13 + $0x18] sm:$0xff] %v644
      %651 = vst [vmem:[#allocation13 + $0x20] sm:$0xff] %v645
      %652 = vst [vmem:[#allocation13 + $0x28] sm:$0xff] %v646
    $region53: #{tpu_custom_call.1} parent=1 // pred_fallthru
      _
    // Predicated region
    $region54: #{tpu_custom_call.1} parent=1 // pred_check
      _
    $region55: #{tpu_custom_call.1} parent=1 // pred_check_branch
      %654 = sbr.rel (0) target = $region57
    $region56: #{tpu_custom_call.1} parent=1 // pred_region
      %656 = vsyncadd [#allocation7], 0
      %s657 = sshll.u32 [#allocation13], 4
      %s658 = int_to_ptr.vmem [resolvable:$true] %s657
      %s659 = sshll.u32 %s6, 4
      %s660 = int_to_ptr.hbm [resolvable:$true] %s659
      %665 = dma.vmem_to_hbm [thread:$0]  %s658, 768, %s660, [#allocation7], 384, 384, 24
    $region57: #{tpu_custom_call.1} parent=1 // pred_fallthru
      _
    // Predicated region
    $region58: #{tpu_custom_call.1} parent=1 // pred_check
      _
    $region59: #{tpu_custom_call.1} parent=1 // pred_check_branch
      %667 = sbr.rel (0) target = $region61
    $region60: #{tpu_custom_call.1} parent=1 // pred_region
      %669 = dma.done [#allocation7], 768
    $region61: #{tpu_custom_call.1} parent=1 // pred_fallthru
      _
    %670 = vsyncpa [#allocation6], 1
    %671 = vsyncpa [#allocation9], 1
    %672 = vsyncpa [#allocation12], 1
    %673 = vsyncpa [#allocation7], 1

</llo_original>
